<compile_context>
chip_gen: v5e
topology: v5e:2x2
jax: 0.10.0
libtpu: 0.0.40
codegen_flags: <defaults>
</compile_context>

<pallas_src>
import functools
import math

import jax
import jax.numpy as jnp
from jax.experimental import pallas as pl
from jax.experimental.pallas import tpu as pltpu


# ---------------------------------------------------------------------------
# Activations (mirror of the PyTorch ACT2FN table)
# ---------------------------------------------------------------------------
_SQRT_2_OVER_PI = 0.7978845608028654


def _apply_act(x, act):
    if act is None or act == "identity":
        return x
    if act == "relu":
        return jnp.maximum(x, 0.0)
    if act == "swish":
        return x * jax.nn.sigmoid(x)
    if act in ("gelu", "gelu_custom"):                      # exact erf gelu
        return x * 0.5 * (1.0 + jax.lax.erf(x * (1.0 / math.sqrt(2.0))))
    if act == "gelu_google":                                # tanh approximation
        return 0.5 * x * (1.0 + jnp.tanh(_SQRT_2_OVER_PI * (x + 0.044715 * x * x * x)))
    raise ValueError(f"unknown activation: {act}")


# ---------------------------------------------------------------------------
# VMEM sizing helpers
# ---------------------------------------------------------------------------
def _round_up(v, m):
    return ((v + m - 1) // m) * m


def _vmem_limit_bytes():
    """Generation-aware scoped-VMEM limit (v5e/v6e: 128 MiB phys, v7x: 64 MiB)."""
    try:
        cap = int(pltpu.get_tpu_info().vmem_capacity_bytes)
    except Exception:
        cap = 64 * 1024 * 1024  # conservative fallback == v7x per-core capacity
    # Raise the small default scoped limit but leave headroom for compiler
    # internal scratch; never ask for more than ~96 MiB even on 128 MiB parts.
    return min(cap * 3 // 4, 96 * 1024 * 1024)


def _pick_tile_rows(rows, hidden, itemsize, vmem_limit):
    """Largest row tile that keeps the double-buffered pipeline inside VMEM."""
    # Sub-32-bit dtypes pack rows along sublanes: align to 8 / 16 / 32 rows.
    row_align = max(8, 32 // itemsize)
    if rows <= row_align:
        return rows  # single tile == full array (always a legal block shape)
    # Per-row VMEM footprint: double-buffered input + output blocks (input
    # dtype) plus ~2 f32-sized intermediates the compiler may materialize.
    per_row = hidden * (4 * itemsize + 2 * 4)
    # Review #1: 2x double-buffering is already charged above -> size directly
    # against ~80% of the scoped limit, no extra //2 hedge.
    budget = (vmem_limit * 4) // 5
    tile = budget // max(per_row, 1)
    # Review #2: cap by bytes (<= ~8 MiB per input block), not a fixed 1024-row
    # cap, so small-hidden tiles stay large enough to amortize the ~0.35us/step
    # fixed grid overhead.
    max_block_bytes = 8 * 1024 * 1024
    tile = min(tile, max(row_align, max_block_bytes // max(hidden * itemsize, 1)))
    tile = max(row_align, (tile // row_align) * row_align)
    if tile >= rows:
        if rows > 2 * row_align:
            # Review #3: keep >= 2 roughly-equal blocks so v7x can shard the row
            # grid across its two TensorCores (negligible cost on 1-TC parts).
            tile = _round_up(pl.cdiv(rows, 2), row_align)
        else:
            return rows
    # Balance the grid: equal-ish steps, avoid a tiny ragged last tile.
    n_steps = pl.cdiv(rows, tile)
    tile = min(tile, _round_up(pl.cdiv(rows, n_steps), row_align))
    return int(tile)


# ---------------------------------------------------------------------------
# Kernel 1: standalone ScaleNorm
# ---------------------------------------------------------------------------
def _scalenorm_kernel(g_ref, x_ref, o_ref, *, eps):
    # g_ref: (1, 1) scalar parameter in SMEM
    # x_ref / o_ref: (tile_rows, hidden) VMEM tiles
    x = x_ref[...].astype(jnp.float32)
    sq_sum = jnp.sum(x * x, axis=-1, keepdims=True)            # (tile_rows, 1)
    # clamp(norm, eps) == clamp(sq_sum, eps^2); a single EUP rsqrt replaces the
    # sqrt + f32 divide (EUP has its own VLIW slot -> effectively free).
    inv_norm = jax.lax.rsqrt(jnp.maximum(sq_sum, eps * eps))   # 1 / max(||x||, eps)
    o_ref[...] = (x * (g_ref[0, 0] * inv_norm)).astype(o_ref.dtype)


def scale_norm(x, g, *, eps=1e-6, tile_rows=None, vmem_limit_bytes=None):
    """ScaleNorm over the last axis of x: x * g / max(||x||_2, eps).

    Fast path expects hidden (last dim) to be a multiple of 128 (lane-dense
    stores); hidden < 128 still works via a full-width block but lowers to
    masked lane-partial stores -> documented SLOW PATH (review #5).
    """
    orig_shape = x.shape
    hidden = int(orig_shape[-1])
    rows = int(math.prod(orig_shape[:-1])) if len(orig_shape) > 1 else 1
    x2 = x.reshape(rows, hidden)
    itemsize = jnp.dtype(x.dtype).itemsize

    vmem_limit = (int(vmem_limit_bytes) if vmem_limit_bytes is not None
                  else _vmem_limit_bytes())
    if tile_rows is None:
        tile_rows = _pick_tile_rows(rows, hidden, itemsize, vmem_limit)
    tile_rows = int(min(tile_rows, rows))

    num_steps = pl.cdiv(rows, tile_rows)
    grid = (num_steps,)   # ragged last tile: reads padded, writes masked

    x_index_map = lambda i: (i, 0)
    x_spec = pl.BlockSpec((tile_rows, hidden), x_index_map)
    if num_steps >= 3 and tile_rows < 512:
        # Review #6: deeper input buffering hides DMA issue latency when tiles
        # are small (mostly a v7x concern).  Fall back silently if unsupported.
        try:
            x_spec = pl.BlockSpec((tile_rows, hidden), x_index_map,
                                  pipeline_mode=pl.Buffered(3))
        except (AttributeError, TypeError):
            x_spec = pl.BlockSpec((tile_rows, hidden), x_index_map)

    g_arr = jnp.asarray(g, dtype=jnp.float32).reshape(1, 1)
    kernel = functools.partial(_scalenorm_kernel, eps=float(eps))

    out_itemsize = itemsize  # output dtype == input dtype here
    # Review #7: count upcast-mul, square, reduce-add, g*scale, final scale-mul.
    cost = pl.CostEstimate(
        flops=5 * rows * hidden,
        transcendentals=rows,                         # one rsqrt per row
        bytes_accessed=rows * hidden * (itemsize + out_itemsize) + 4,
    )

    out = pl.pallas_call(
        kernel,
        out_shape=jax.ShapeDtypeStruct((rows, hidden), x.dtype),
        grid=grid,
        in_specs=[
            pl.BlockSpec((1, 1), lambda i: (0, 0),
                         memory_space=pltpu.MemorySpace.SMEM),
            x_spec,
        ],
        out_specs=pl.BlockSpec((tile_rows, hidden), lambda i: (i, 0)),
        compiler_params=pltpu.CompilerParams(
            dimension_semantics=("parallel",),   # lets v7x shard rows over 2 TCs
            vmem_limit_bytes=int(vmem_limit),
        ),
        cost_estimate=cost,
    )(g_arr, x2)

    return out.reshape(orig_shape)


# ---------------------------------------------------------------------------
# Kernel 2: ScaleNorm fused into a Linear (+bias +activation)  (review #4)
# ---------------------------------------------------------------------------
def _scale_norm_linear_kernel(g_ref, x_ref, w_ref, b_ref, o_ref, scale_ref, *, eps, act):
    # grid = (row_tiles, n_tiles); j (columns) is the inner axis so the x block
    # (i, 0) stays VMEM-resident across j and the per-row scale is reused.
    @pl.when(pl.program_id(1) == 0)
    def _():
        xf = x_ref[...].astype(jnp.float32)
        sq = jnp.sum(xf * xf, axis=-1, keepdims=True)
        scale_ref[...] = g_ref[0, 0] * jax.lax.rsqrt(jnp.maximum(sq, eps * eps))

    xn = x_ref[...].astype(jnp.float32) * scale_ref[...]       # normalized LHS tile
    acc = jnp.dot(xn, w_ref[...].astype(jnp.float32),
                  preferred_element_type=jnp.float32)
    acc = acc + b_ref[...].astype(jnp.float32)
    o_ref[...] = _apply_act(acc, act).astype(o_ref.dtype)


def scale_norm_linear(x, g, w, b, *, eps=1e-6, act=None):
    """y = act( ScaleNorm(x) @ w + b ), with the norm fused into the matmul LHS.

    w layout is (in_features, out_features); b is (out_features,)-like.
    The rows*hidden normalized intermediate never touches HBM.
    """
    orig_shape = x.shape
    K = int(orig_shape[-1])
    rows = int(math.prod(orig_shape[:-1])) if len(orig_shape) > 1 else 1
    assert int(w.shape[0]) == K, "weight must be (in_features, out_features)"
    N = int(w.shape[1])

    x2 = x.reshape(rows, K)
    b2 = jnp.asarray(b, dtype=jnp.float32).reshape(1, N)
    g_arr = jnp.asarray(g, dtype=jnp.float32).reshape(1, 1)

    tile_rows = rows if rows <= 256 else 256
    tile_n = N if N <= 512 else 512
    grid = (pl.cdiv(rows, tile_rows), pl.cdiv(N, tile_n))

    kernel = functools.partial(_scale_norm_linear_kernel, eps=float(eps), act=act)
    out = pl.pallas_call(
        kernel,
        out_shape=jax.ShapeDtypeStruct((rows, N), x.dtype),
        grid=grid,
        in_specs=[
            pl.BlockSpec((1, 1), lambda i, j: (0, 0),
                         memory_space=pltpu.MemorySpace.SMEM),
            pl.BlockSpec((tile_rows, K), lambda i, j: (i, 0)),   # full-K LHS block
            pl.BlockSpec((K, tile_n), lambda i, j: (0, j)),
            pl.BlockSpec((1, tile_n), lambda i, j: (0, j)),
        ],
        out_specs=pl.BlockSpec((tile_rows, tile_n), lambda i, j: (i, j)),
        scratch_shapes=[pltpu.VMEM((tile_rows, 1), jnp.float32)],
        compiler_params=pltpu.CompilerParams(
            dimension_semantics=("parallel", "arbitrary"),
            vmem_limit_bytes=_vmem_limit_bytes(),
        ),
    )(g_arr, x2, w, b2)
    return out.reshape(orig_shape[:-1] + (N,))


# ---------------------------------------------------------------------------
# Kernel 3: plain Linear (+bias +activation) for ff2hidden
# ---------------------------------------------------------------------------
def _linear_kernel(x_ref, w_ref, b_ref, o_ref, *, act):
    acc = jnp.dot(x_ref[...].astype(jnp.float32), w_ref[...].astype(jnp.float32),
                  preferred_element_type=jnp.float32)
    acc = acc + b_ref[...].astype(jnp.float32)
    o_ref[...] = _apply_act(acc, act).astype(o_ref.dtype)


def linear(x, w, b, *, act=None):
    # TODO(synk): K kept as a single full block (fine for encoder-sized
    # hidden/hidden_ff); very large K would want a k-grid axis + f32 accumulator.
    orig_shape = x.shape
    K = int(orig_shape[-1])
    rows = int(math.prod(orig_shape[:-1])) if len(orig_shape) > 1 else 1
    assert int(w.shape[0]) == K
    N = int(w.shape[1])

    x2 = x.reshape(rows, K)
    b2 = jnp.asarray(b, dtype=jnp.float32).reshape(1, N)

    tile_rows = rows if rows <= 256 else 256
    tile_n = N if N <= 512 else 512
    grid = (pl.cdiv(rows, tile_rows), pl.cdiv(N, tile_n))

    kernel = functools.partial(_linear_kernel, act=act)
    out = pl.pallas_call(
        kernel,
        out_shape=jax.ShapeDtypeStruct((rows, N), x.dtype),
        grid=grid,
        in_specs=[
            pl.BlockSpec((tile_rows, K), lambda i, j: (i, 0)),
            pl.BlockSpec((K, tile_n), lambda i, j: (0, j)),
            pl.BlockSpec((1, tile_n), lambda i, j: (0, j)),
        ],
        out_specs=pl.BlockSpec((tile_rows, tile_n), lambda i, j: (i, j)),
        compiler_params=pltpu.CompilerParams(
            dimension_semantics=("parallel", "arbitrary"),
            vmem_limit_bytes=_vmem_limit_bytes(),
        ),
    )(x2, w, b2)
    return out.reshape(orig_shape[:-1] + (N,))


# ---------------------------------------------------------------------------
# Kernel 4: Highway-Transformer Gate (fused 6-matmul + elementwise combine)
# ---------------------------------------------------------------------------
def _gate_kernel(x_ref, y_ref, wr_ref, ur_ref, wz_ref, uz_ref, wg_ref, ug_ref,
                 bz_ref, o_ref):
    x = x_ref[...].astype(jnp.float32)
    y = y_ref[...].astype(jnp.float32)

    def mm(a, w_ref):
        return jnp.dot(a, w_ref[...].astype(jnp.float32),
                       preferred_element_type=jnp.float32)

    r = jax.nn.sigmoid(mm(y, wr_ref) + mm(x, ur_ref))
    z = jax.nn.sigmoid(mm(y, wz_ref) + bz_ref[...].astype(jnp.float32) + mm(x, uz_ref))
    h = jnp.tanh(mm(y, wg_ref) + mm(r * x, ug_ref))
    o_ref[...] = ((1.0 - z) * x + z * h).astype(o_ref.dtype)


def gate(x, y, p):
    """g = (1-z)*x + z*h with r/z/h as in the PyTorch Gate (weights are (in,out))."""
    orig_shape = x.shape
    H = int(orig_shape[-1])
    rows = int(math.prod(orig_shape[:-1])) if len(orig_shape) > 1 else 1
    x2 = x.reshape(rows, H)
    y2 = y.reshape(rows, H)

    tile_rows = rows if rows <= 256 else 256
    grid = (pl.cdiv(rows, tile_rows),)

    row_spec = pl.BlockSpec((tile_rows, H), lambda i: (i, 0))
    w_spec = pl.BlockSpec((H, H), lambda i: (0, 0))      # weights stay VMEM-resident
    b_spec = pl.BlockSpec((1, H), lambda i: (0, 0))

    out = pl.pallas_call(
        _gate_kernel,
        out_shape=jax.ShapeDtypeStruct((rows, H), x.dtype),
        grid=grid,
        in_specs=[row_spec, row_spec,
                  w_spec, w_spec, w_spec, w_spec, w_spec, w_spec, b_spec],
        out_specs=row_spec,
        compiler_params=pltpu.CompilerParams(
            dimension_semantics=("parallel",),
            vmem_limit_bytes=_vmem_limit_bytes(),
        ),
    )(x2, y2, p["wr"], p["ur"], p["wz"], p["uz"], p["wg"], p["ug"], p["bz"])
    return out.reshape(orig_shape)


# ---------------------------------------------------------------------------
# EncoderLayer forward (Pallas path) and pure-JAX reference
# ---------------------------------------------------------------------------
def attention_stub(x, mask, n_heads):
    # TODO(synk): MultiHeadAttention implementation is not part of the spec;
    # parameter-free multi-head softmax self-attention stand-in, left to XLA.
    B, S, H = x.shape
    d = H // n_heads
    q = x.reshape(B, S, n_heads, d).transpose(0, 2, 1, 3)
    scores = jnp.einsum("bhqd,bhkd->bhqk", q, q) / jnp.sqrt(jnp.float32(d))
    if mask is not None:
        scores = jnp.where(mask, scores, jnp.float32(-1e9))
    p = jax.nn.softmax(scores, axis=-1)
    o = jnp.einsum("bhqk,bhkd->bhqd", p, q)
    return o.transpose(0, 2, 1, 3).reshape(B, S, H)


def encoder_layer_forward(x, params, *, mask=None, n_heads, act="gelu_google", eps=1e-6):
    # --- attention sublayer (pre_norm): gate(x, attention(scale_norm(x))) ---
    xn = scale_norm(x, params["g_attn"], eps=eps)
    y = attention_stub(xn, mask, n_heads)
    x1 = gate(x, y, params["gate_attn"])
    # --- FFN sublayer: gate(x1, ff2hidden(act(hidden2ff(scale_norm(x1))))) ---
    # ScaleNorm fused into the hidden2ff matmul (review #4): no rows*hidden
    # HBM round trip for the normalized intermediate.
    h = scale_norm_linear(x1, params["g_ffn"], params["ffn"]["w1"],
                          params["ffn"]["b1"], eps=eps, act=act)
    z = linear(h, params["ffn"]["w2"], params["ffn"]["b2"])
    # TODO(synk): nn.Dropout (before the activation) is identity at inference.
    return gate(x1, z, params["gate_ffn"])


def scale_norm_ref(x, g, *, eps=1e-6):
    norm = jnp.linalg.norm(x.astype(jnp.float32), ord=2, axis=-1, keepdims=True)
    norm = jnp.maximum(norm, eps)
    return (x.astype(jnp.float32) * (g / norm)).astype(x.dtype)


def gate_ref(x, y, p):
    r = jax.nn.sigmoid(y @ p["wr"] + x @ p["ur"])
    z = jax.nn.sigmoid(y @ p["wz"] + p["bz"] + x @ p["uz"])
    h = jnp.tanh(y @ p["wg"] + (r * x) @ p["ug"])
    return (1.0 - z) * x + z * h


def encoder_layer_ref(x, params, *, mask=None, n_heads, act="gelu_google", eps=1e-6):
    y = attention_stub(scale_norm_ref(x, params["g_attn"], eps=eps), mask, n_heads)
    x1 = gate_ref(x, y, params["gate_attn"])
    xn = scale_norm_ref(x1, params["g_ffn"], eps=eps)
    h = _apply_act(xn @ params["ffn"]["w1"] + params["ffn"]["b1"], act)
    z = h @ params["ffn"]["w2"] + params["ffn"]["b2"]
    return gate_ref(x1, z, params["gate_ffn"])


def init_encoder_params(key, hidden, hidden_ff):
    ks = jax.random.split(key, 6)

    def lin(k, fan_in, fan_out):
        # (in_features, out_features) layout == transposed PyTorch nn.Linear weight
        return jax.random.normal(k, (fan_in, fan_out), jnp.float32) / jnp.sqrt(
            jnp.float32(fan_in))

    def gate_params(kk):
        k = jax.random.split(kk, 6)
        return dict(
            wr=lin(k[0], hidden, hidden), ur=lin(k[1], hidden, hidden),
            wz=lin(k[2], hidden, hidden), uz=lin(k[3], hidden, hidden),
            wg=lin(k[4], hidden, hidden), ug=lin(k[5], hidden, hidden),
            bz=jnp.full((1, hidden), -2.0, jnp.float32),   # Gate.init_bias(-2)
        )

    return dict(
        g_attn=jnp.sqrt(jnp.float32(hidden)),              # ScaleNorm g init
        g_ffn=jnp.sqrt(jnp.float32(hidden)),
        gate_attn=gate_params(ks[0]),
        gate_ffn=gate_params(ks[1]),
        ffn=dict(
            w1=lin(ks[2], hidden, hidden_ff),
            b1=0.01 * jax.random.normal(ks[3], (1, hidden_ff), jnp.float32),
            w2=lin(ks[4], hidden_ff, hidden),
            b2=0.01 * jax.random.normal(ks[5], (1, hidden), jnp.float32),
        ),
    )


if __name__ == "__main__":
    eps = 1e-6
    key = jax.random.PRNGKey(0)

    # --- standalone ScaleNorm checks ------------------------------------
    cases = [
        ((2, 8, 128), jnp.float32, None),    # lane-dense fast path
        ((2, 8, 32), jnp.float32, None),     # hidden<128 documented slow path
        ((3, 7, 128), jnp.bfloat16, None),   # ragged rows + bf16 packing
        ((4, 64, 128), jnp.float32, 64),     # multi-step grid -> Buffered(3) input
    ]
    for i, (shape, dtype, forced_tile) in enumerate(cases):
        k = jax.random.fold_in(key, i)
        x = jax.random.normal(k, shape, dtype=jnp.float32).astype(dtype)
        g = jnp.sqrt(jnp.float32(shape[-1]))
        out = jax.block_until_ready(scale_norm(x, g, eps=eps, tile_rows=forced_tile))
        ref = scale_norm_ref(x, g, eps=eps)
        assert out.shape == x.shape and out.dtype == x.dtype
        tol = 1e-5 if dtype == jnp.float32 else 1e-2
        assert jnp.allclose(out.astype(jnp.float32), ref.astype(jnp.float32),
                            atol=tol, rtol=tol), f"scale_norm mismatch {shape} {dtype}"

    # --- full EncoderLayer forward (pre_norm) ----------------------------
    batch, seq, hidden, hidden_ff, n_heads = 2, 8, 128, 256, 4
    act = "gelu_google"
    params = init_encoder_params(jax.random.fold_in(key, 100), hidden, hidden_ff)
    x = jax.random.normal(jax.random.fold_in(key, 101), (batch, seq, hidden),
                          jnp.float32)

    out = jax.block_until_ready(
        encoder_layer_forward(x, params, mask=None, n_heads=n_heads, act=act, eps=eps))
    ref = encoder_layer_ref(x, params, mask=None, n_heads=n_heads, act=act, eps=eps)
    assert out.shape == ref.shape and out.dtype == x.dtype
    max_err = float(jnp.max(jnp.abs(out - ref)))
    assert jnp.allclose(out, ref, atol=2e-2, rtol=2e-2), \
        f"encoder layer mismatch vs reference: max abs err {max_err}"

    print("KERNEL_OK")
</pallas_src>

<mosaic_0001>
module attributes {stable_mosaic.version = 11 : i64} {
  func.func @_scalenorm_kernel(%arg0: i32, %arg1: memref<1x1xf32, #tpu.memory_space<smem>>, %arg2: memref<16x128xf32, #tpu.memory_space<vmem>>, %arg3: memref<16x128xf32, #tpu.memory_space<vmem>>) attributes {dimension_semantics = [#tpu.dimension_semantics<parallel>], iteration_bounds = array<i64: 1>, scalar_prefetch = 0 : i64, scratch_operands = 0 : i64, tpu.core_type = #tpu.core_type<tc>, window_params = [{transform_indices = @transform_0, window_bounds = array<i64: 1, 1>}, {transform_indices = @transform_1, window_bounds = array<i64: 16, 128>}, {transform_indices = @transform_2, window_bounds = array<i64: 16, 128>}]} {
    %c0 = arith.constant 0 : index
    %c0_0 = arith.constant 0 : index
    %0 = vector.load %arg2[%c0, %c0_0] : memref<16x128xf32, #tpu.memory_space<vmem>>, vector<16x128xf32>
    %1 = arith.mulf %0, %0 : vector<16x128xf32>
    %cst = arith.constant dense<0.000000e+00> : vector<16xf32>
    %2 = vector.multi_reduction <add>, %1, %cst [1] : vector<16x128xf32> to vector<16xf32>
    %3 = vector.shape_cast %2 : vector<16xf32> to vector<16x1xf32>
    %cst_1 = arith.constant 9.99999996E-13 : f32
    %4 = vector.broadcast %cst_1 : f32 to vector<16x1xf32>
    %5 = arith.maximumf %3, %4 : vector<16x1xf32>
    %6 = math.rsqrt %5 : vector<16x1xf32>
    %c0_2 = arith.constant 0 : index
    %c0_3 = arith.constant 0 : index
    %7 = memref.load %arg1[%c0_2, %c0_3] : memref<1x1xf32, #tpu.memory_space<smem>>
    %8 = vector.broadcast %7 : f32 to vector<16x1xf32>
    %9 = arith.mulf %8, %6 : vector<16x1xf32>
    %10 = vector.broadcast %9 : vector<16x1xf32> to vector<16x128xf32>
    %11 = arith.mulf %0, %10 : vector<16x128xf32>
    %c0_4 = arith.constant 0 : index
    %c0_5 = arith.constant 0 : index
    %12 = vector.load %arg3[%c0_4, %c0_5] : memref<16x128xf32, #tpu.memory_space<vmem>>, vector<16x128xf32>
    tpu.vector_store %arg3[%c0_4, %c0_5], %11 {strides = array<i32>} : memref<16x128xf32, #tpu.memory_space<vmem>>, vector<16x128xf32>,
    return
  }
  func.func @transform_0(%arg0: i32) -> (i32, i32) {
    %c0_i32 = arith.constant 0 : i32
    %c0_i32_0 = arith.constant 0 : i32
    %c0_i32_1 = arith.constant 0 : i32
    return %c0_i32, %c0_i32_0 : i32, i32
  }
  func.func @transform_1(%arg0: i32) -> (i32, i32) {
    %c0_i32 = arith.constant 0 : i32
    %c0_i32_0 = arith.constant 0 : i32
    return %arg0, %c0_i32 : i32, i32
  }
  func.func @transform_2(%arg0: i32) -> (i32, i32) {
    %c0_i32 = arith.constant 0 : i32
    %c0_i32_0 = arith.constant 0 : i32
    return %arg0, %c0_i32 : i32, i32
  }
}

</mosaic_0001>

<llo_original>
// kernel: tpu_custom_call.1
$region0: #{tpu_custom_call.1}
  #allocation0 [shape = 'u32[]', space=smem, size = 0x4, offset = 0x4, fixed_abs, tag = 'smem constant byte address 0x4 - core index']
  #allocation1 [shape = 'u32[72,128]{1,0:T(1,128)}', space=vmem, size = 0x9000, scoped, tag = 'internal scratch']
  #allocation2 [shape = 'f32[1,1]{1,0:T(1,128)S(6)}', space=smem, size = 0x200, scoped, tag = 'scoped memory for tpu_custom_call.1']
  %s0 = inlined_call_operand.<no memory space> [shape: f32[1,1], index: 0, kind: input, shape index: {}]
  %s1 = inlined_call_operand.hbm [shape: f32[16,128], index: 1, kind: input, shape index: {}]
  %s2 = inlined_call_operand.hbm [shape: f32[16,128], index: 2, kind: output, shape index: {}]
  %s3 = sld [smem:[#allocation0]]
  $region22: #{tpu_custom_call.1} parent=0
    _
  %s5 = ssub.s32 1, %s3
  %s6 = scalar_select 0, %s5, %s3
  %7 = sst [smem:[#allocation2]] %s0
  $region1: #{tpu_custom_call.1} parent=0
    #allocation3 [shape = 'u8[8192]{0}', space=vmem, size = 0x2000, scoped, tag = 'input window, operand 1, single buffered']
    #allocation4 [shape = 's32[1]{0}', space=sflag, size = 0x4, scoped, tag = 'scoped memory for tpu_custom_call.1']
    #allocation5 [shape = 's32[1]{0}', space=sflag, size = 0x4, scoped, tag = 'scoped memory for tpu_custom_call.1']
    #allocation6 [shape = 'u8[8192]{0}', space=vmem, size = 0x2000, scoped, tag = 'output window, operand 0, single buffered']
    %8 = vsyncpa [#allocation4], 0
    %9 = vsyncpa [#allocation5], 0
    // Predicated region
    $region2: #{tpu_custom_call.1} parent=1 // pred_check
      _
    $region3: #{tpu_custom_call.1} parent=1 // pred_check_branch
      %11 = sbr.rel (0) target = $region5
    $region4: #{tpu_custom_call.1} parent=1 // pred_region
      _
    $region5: #{tpu_custom_call.1} parent=1 // pred_fallthru
      _
    // Predicated region
    $region6: #{tpu_custom_call.1} parent=1 // pred_check
      _
    $region7: #{tpu_custom_call.1} parent=1 // pred_check_branch
      %13 = sbr.rel (0) target = $region9
    $region8: #{tpu_custom_call.1} parent=1 // pred_region
      %15 = vsyncadd [#allocation4], 0
      %s16 = sshll.u32 %s1, 4
      %s17 = int_to_ptr.hbm [resolvable:$true] %s16
      %s18 = sshll.u32 [#allocation3], 4
      %s19 = int_to_ptr.vmem [resolvable:$true] %s18
      %24 = dma.hbm_to_vmem [thread:$0]  %s17, 256, %s19, [#allocation4], 128, 128, 8
    $region9: #{tpu_custom_call.1} parent=1 // pred_fallthru
      _
    // Predicated region
    $region10: #{tpu_custom_call.1} parent=1 // pred_check
      _
    $region11: #{tpu_custom_call.1} parent=1 // pred_check_branch
      %26 = sbr.rel (0) target = $region13
    $region12: #{tpu_custom_call.1} parent=1 // pred_region
      %28 = dma.done [#allocation4], 256
    $region13: #{tpu_custom_call.1} parent=1 // pred_fallthru
      _
    %v29 = vld [vmem:[#allocation3] sm:$0xff]
    %v30 = vld [vmem:[#allocation3 + $0x8] sm:$0xff]
    %v31 = vmul.f32 %v29, %v29
    %v32 = vmul.f32 %v30, %v30
    %33 = vadd.xlane.f32.xlu0 %v31
    %v34 = vpop.xlane.xlu0 %33
    %35 = vadd.xlane.f32.xlu0 %v32
    %v36 = vpop.xlane.xlu0 %35
    %v37 = vmax.f32 %v34, 1e-12
    %v38 = vmax.f32 %v36, 1e-12
    %v39 = vrsqrt.pop %v37
    %v40 = vmul.f32 %v39, %v37
    %v41 = vmul.f32 %v40, %v39
    %v42 = vmul.f32 0.5, %v41
    %v43 = vsub.f32 1.5, %v42
    %v44 = vmul.f32 %v39, %v43
    %vm45 = vweird.f32 %v37
    %vm46 = vweird.f32 %v39
    %vm47 = vmor %vm45, %vm46
    %v48 = vsel %vm47, %v39, %v44
    %v49 = vrsqrt.pop %v38
    %v50 = vmul.f32 %v49, %v38
    %v51 = vmul.f32 %v50, %v49
    %v52 = vmul.f32 0.5, %v51
    %v53 = vsub.f32 1.5, %v52
    %v54 = vmul.f32 %v49, %v53
    %vm55 = vweird.f32 %v38
    %vm56 = vweird.f32 %v49
    %vm57 = vmor %vm55, %vm56
    %v58 = vsel %vm57, %v49, %v54
    %s59 = sld [smem:[#allocation2]]
    %v60 = vstv %s59
    %v61 = vmul.f32 %v60, %v48
    %v62 = vmul.f32 %v60, %v58
    %v63 = vmul.f32 %v29, %v61
    %v64 = vmul.f32 %v30, %v62
    %65 = vst [vmem:[#allocation6] sm:$0xff] %v63
    %66 = vst [vmem:[#allocation6 + $0x8] sm:$0xff] %v64
    // Predicated region
    $region14: #{tpu_custom_call.1} parent=1 // pred_check
      _
    $region15: #{tpu_custom_call.1} parent=1 // pred_check_branch
      %68 = sbr.rel (0) target = $region17
    $region16: #{tpu_custom_call.1} parent=1 // pred_region
      %70 = vsyncadd [#allocation5], 0
      %s71 = sshll.u32 [#allocation6], 4
      %s72 = int_to_ptr.vmem [resolvable:$true] %s71
      %s73 = sshll.u32 %s2, 4
      %s74 = int_to_ptr.hbm [resolvable:$true] %s73
      %79 = dma.vmem_to_hbm [thread:$0]  %s72, 256, %s74, [#allocation5], 128, 128, 8
    $region17: #{tpu_custom_call.1} parent=1 // pred_fallthru
      _
    // Predicated region
    $region18: #{tpu_custom_call.1} parent=1 // pred_check
      _
    $region19: #{tpu_custom_call.1} parent=1 // pred_check_branch
      %81 = sbr.rel (0) target = $region21
    $region20: #{tpu_custom_call.1} parent=1 // pred_region
      %83 = dma.done [#allocation5], 256
    $region21: #{tpu_custom_call.1} parent=1 // pred_fallthru
      _
    %84 = vsyncpa [#allocation4], 1
    %85 = vsyncpa [#allocation5], 1

</llo_original>
